<compile_context>
chip_gen: v6e
topology: v6e:2x2x1
jax: 0.10.0
libtpu: 0.0.40
codegen_flags: <defaults>
</compile_context>

<pallas_src>
import jax
import jax.numpy as jnp
from jax import lax
from jax.experimental import pallas as pl
from jax.experimental.pallas import tpu as pltpu

_LANE = 128
_SUBLANE = 8
_MAX_BLOCK_ROWS = 4096     # (4096, 128) f32 tile = 2 MiB / operand / buffer
_PAR_SPLIT_ROWS = 256      # split across the "parallel" axis above this many rows


def _cdiv(a, b):
    return -(-a // b)


def _round_up(x, m):
    return _cdiv(x, m) * m


def _row_granule(dtype):
    # Second-minor tile granule: 8 for 4-byte, 16 for 2-byte, 32 for 1-byte dtypes.
    return max(_SUBLANE, 32 // jnp.dtype(dtype).itemsize)


def _prep_2d(arr, granule):
    """Flatten to a lane-dense (rows, 128) view, keeping the native dtype.

    No copy is made when arr.size is already a multiple of granule*128 (true
    for typical image tensors); otherwise the flat array is padded and the
    padded elements are masked out in-kernel (pad value is irrelevant).
    """
    n = int(arr.size)
    rows = _round_up(max(_cdiv(n, _LANE), granule), granule)
    total = rows * _LANE
    flat = arr.reshape(-1)
    if total != n:
        # TODO(synk): ragged sizes still take one padded copy here; a fully
        # copy-free ragged path would need manual DMA of pl.ds chunks.
        flat = jnp.pad(flat, (0, total - n))
    return flat.reshape(rows, _LANE), n, rows


def _make_fused_kernel(*, n_blk, block_rows, n_img, n_pred, mask_img, mask_pred):
    img_rows_full, img_rem = divmod(n_img, _LANE)
    pred_rows_full, pred_rem = divmod(n_pred, _LANE)

    def _valid_mask(shape, base_row, rows_full, rem):
        row = base_row + lax.broadcasted_iota(jnp.int32, shape, 0)
        valid = row < rows_full
        if rem:
            lane = lax.broadcasted_iota(jnp.int32, shape, 1)
            valid = valid | ((row == rows_full) & (lane < rem))
        return valid

    def kernel(fake_ref, real_ref, pred_ref, l1_ref, bce_ref):
        i = pl.program_id(0)   # "parallel" axis (multi-TensorCore split)
        j = pl.program_id(1)   # "arbitrary" reduction axis

        # NOTE: the in-place accumulation below is only correct because the
        # output BlockSpec is invariant along the "arbitrary" j axis (the
        # block stays resident in VMEM across j).  Never mark j "parallel".
        @pl.when(j == 0)
        def _():
            l1_ref[...] = jnp.zeros_like(l1_ref)
            bce_ref[...] = jnp.zeros_like(bce_ref)

        a = fake_ref[...].astype(jnp.float32)
        b = real_ref[...].astype(jnp.float32)
        val = jnp.abs(a - b)
        if mask_img:
            base = (i * n_blk + j) * block_rows
            val = jnp.where(
                _valid_mask(val.shape, base, img_rows_full, img_rem), val, 0.0)
        l1_ref[...] += val.reshape(-1, _SUBLANE, _LANE).sum(axis=0)

        # BCE-with-logits against an all-ones target == softplus(-x), stable:
        #   softplus(-x) = max(-x, 0) + log1p(exp(-|x|))
        # fake_pred is tiny and VMEM-resident, so reduce it once on the very
        # first grid step; every other step skips this cold path entirely.
        @pl.when((i == 0) & (j == 0))
        def _():
            x = pred_ref[...].astype(jnp.float32)
            sp = jnp.maximum(-x, 0.0) + jnp.log1p(jnp.exp(-jnp.abs(x)))
            if mask_pred:
                sp = jnp.where(
                    _valid_mask(sp.shape, 0, pred_rows_full, pred_rem), sp, 0.0)
            bce_ref[...] = sp.reshape(-1, _SUBLANE, _LANE).sum(axis=0)

    return kernel


def generator_loss(fake, real, fake_pred, alpha=100.0):
    """loss = BCEWithLogits(fake_pred, ones) + alpha * L1(fake, real)."""
    assert fake.shape == real.shape, (fake.shape, real.shape)

    g_img = max(_row_granule(fake.dtype), _row_granule(real.dtype))
    fake2d, n_img, img_rows = _prep_2d(fake, g_img)
    real2d, _, _ = _prep_2d(real, g_img)

    g_pred = _row_granule(fake_pred.dtype)
    pred2d, n_pred, pred_rows = _prep_2d(fake_pred, g_pred)
    # TODO(synk): fake_pred (patch-discriminator logits) is assumed small
    # enough to sit resident in VMEM; a huge fake_pred would need streaming.

    # Tiling of the streamed fake/real pair.
    n_par = 2 if img_rows >= _PAR_SPLIT_ROWS else 1
    per_par = _round_up(_cdiv(img_rows, n_par), g_img)
    block_rows = min(_MAX_BLOCK_ROWS, per_par)
    n_blk = _cdiv(per_par, block_rows)
    covered_rows = n_par * n_blk * block_rows
    max_blk = _cdiv(img_rows, block_rows) - 1   # last block overlapping real data

    mask_img = covered_rows * _LANE != n_img
    mask_pred = pred_rows * _LANE != n_pred

    kernel = _make_fused_kernel(n_blk=n_blk, block_rows=block_rows,
                                n_img=n_img, n_pred=n_pred,
                                mask_img=mask_img, mask_pred=mask_pred)

    # Grid steps whose intended rows lie entirely past the end of the image
    # are clamped to the last real block; their data is fully masked out, so
    # the DMA never reads out of bounds and nothing is double-counted.
    img_spec = pl.BlockSpec(
        (block_rows, _LANE),
        lambda i, j: (jnp.minimum(i * n_blk + j, max_blk), 0))
    pred_spec = pl.BlockSpec((pred_rows, _LANE), lambda i, j: (0, 0))
    out_spec = pl.BlockSpec((_SUBLANE, _LANE), lambda i, j: (i, 0))

    in_bytes = (fake2d.size * jnp.dtype(fake2d.dtype).itemsize
                + real2d.size * jnp.dtype(real2d.dtype).itemsize
                + pred2d.size * jnp.dtype(pred2d.dtype).itemsize)
    cost = pl.CostEstimate(
        flops=3 * n_img + 5 * n_pred,
        transcendentals=2 * n_pred,
        bytes_accessed=in_bytes + 2 * n_par * _SUBLANE * _LANE * 4,
    )

    l1_part, bce_part = pl.pallas_call(
        kernel,
        out_shape=(jax.ShapeDtypeStruct((n_par * _SUBLANE, _LANE), jnp.float32),
                   jax.ShapeDtypeStruct((n_par * _SUBLANE, _LANE), jnp.float32)),
        grid_spec=pltpu.PrefetchScalarGridSpec(
            num_scalar_prefetch=0,
            grid=(n_par, n_blk),
            in_specs=[img_spec, img_spec, pred_spec],
            out_specs=[out_spec, out_spec],
        ),
        compiler_params=pltpu.CompilerParams(
            dimension_semantics=("parallel", "arbitrary")),
        cost_estimate=cost,
    )(fake2d, real2d, pred2d)

    bce = jnp.sum(bce_part) / n_pred
    l1 = jnp.sum(l1_part) / n_img
    return bce + alpha * l1


def _reference(fake, real, fake_pred, alpha=100.0):
    bce = jnp.mean(jnp.maximum(-fake_pred, 0.0)
                   + jnp.log1p(jnp.exp(-jnp.abs(fake_pred))))
    l1 = jnp.mean(jnp.abs(fake - real))
    return bce + alpha * l1


if __name__ == "__main__":
    loss_fn = jax.jit(generator_loss)
    key = jax.random.PRNGKey(0)
    k1, k2, k3, k4, k5, k6 = jax.random.split(key, 6)

    cases = [
        # Tiny pix2pix-shaped tensors (exercises padded / masked small path).
        ((2, 3, 16, 16), (2, 1, 8, 8), (k1, k2, k3)),
        # Larger images + ragged PatchGAN logits (exercises the two-core
        # split, edge-block row masking and the lane-remainder mask).
        ((1, 3, 160, 160), (1, 1, 30, 30), (k4, k5, k6)),
    ]

    for img_shape, pred_shape, (ka, kb, kc) in cases:
        fake = jax.random.normal(ka, img_shape, jnp.float32)       # generator output
        real = jax.random.normal(kb, img_shape, jnp.float32)       # target image
        fake_pred = jax.random.normal(kc, pred_shape, jnp.float32)  # disc logits

        loss = jax.block_until_ready(loss_fn(fake, real, fake_pred))
        expected = _reference(fake, real, fake_pred)

        assert loss.shape == (), loss.shape
        assert bool(jnp.isfinite(loss))
        assert bool(jnp.allclose(loss, expected, rtol=1e-5, atol=1e-5)), (loss, expected)

    print("KERNEL_OK")
</pallas_src>

<mosaic_0001>
module attributes {stable_mosaic.version = 11 : i64} {
  func.func @kernel(%arg0: i32, %arg1: i32, %arg2: memref<16x128xf32, #tpu.memory_space<vmem>>, %arg3: memref<16x128xf32, #tpu.memory_space<vmem>>, %arg4: memref<8x128xf32, #tpu.memory_space<vmem>>, %arg5: memref<8x128xf32, #tpu.memory_space<vmem>>, %arg6: memref<8x128xf32, #tpu.memory_space<vmem>>) attributes {dimension_semantics = [#tpu.dimension_semantics<parallel>, #tpu.dimension_semantics<arbitrary>], iteration_bounds = array<i64: 1, 1>, scalar_prefetch = 0 : i64, scratch_operands = 0 : i64, tpu.core_type = #tpu.core_type<tc>, window_params = [{transform_indices = @transform_0, window_bounds = array<i64: 16, 128>}, {transform_indices = @transform_1, window_bounds = array<i64: 16, 128>}, {pipeline_mode = #tpu.pipeline_mode<synchronous>, transform_indices = @transform_2, window_bounds = array<i64: 8, 128>}, {transform_indices = @transform_3, window_bounds = array<i64: 8, 128>}, {transform_indices = @transform_4, window_bounds = array<i64: 8, 128>}]} {
    %c0_i32 = arith.constant 0 : i32
    %0 = arith.cmpi eq, %arg1, %c0_i32 : i32
    %1 = arith.extui %0 : i1 to i32
    %c0_i32_0 = arith.constant 0 : i32
    %2 = arith.cmpi ne, %1, %c0_i32_0 : i32
    scf.if %2 {
      %cst_12 = arith.constant 0.000000e+00 : f32
      %27 = vector.broadcast %cst_12 : f32 to vector<8x128xf32>
      %c0_13 = arith.constant 0 : index
      %c0_14 = arith.constant 0 : index
      %28 = vector.load %arg5[%c0_13, %c0_14] : memref<8x128xf32, #tpu.memory_space<vmem>>, vector<8x128xf32>
      tpu.vector_store %arg5[%c0_13, %c0_14], %27 {strides = array<i32>} : memref<8x128xf32, #tpu.memory_space<vmem>>, vector<8x128xf32>,
      %cst_15 = arith.constant 0.000000e+00 : f32
      %29 = vector.broadcast %cst_15 : f32 to vector<8x128xf32>
      %c0_16 = arith.constant 0 : index
      %c0_17 = arith.constant 0 : index
      %30 = vector.load %arg6[%c0_16, %c0_17] : memref<8x128xf32, #tpu.memory_space<vmem>>, vector<8x128xf32>
      tpu.vector_store %arg6[%c0_16, %c0_17], %29 {strides = array<i32>} : memref<8x128xf32, #tpu.memory_space<vmem>>, vector<8x128xf32>,
    } else {
    }
    %c0 = arith.constant 0 : index
    %c0_1 = arith.constant 0 : index
    %3 = vector.load %arg2[%c0, %c0_1] : memref<16x128xf32, #tpu.memory_space<vmem>>, vector<16x128xf32>
    %c0_2 = arith.constant 0 : index
    %c0_3 = arith.constant 0 : index
    %4 = vector.load %arg3[%c0_2, %c0_3] : memref<16x128xf32, #tpu.memory_space<vmem>>, vector<16x128xf32>
    %5 = arith.subf %3, %4 : vector<16x128xf32>
    %6 = math.absf %5 : vector<16x128xf32>
    %c1_i32 = arith.constant 1 : i32
    %7 = arith.muli %arg0, %c1_i32 : i32
    %8 = arith.addi %7, %arg1 : i32
    %c16_i32 = arith.constant 16 : i32
    %9 = arith.muli %8, %c16_i32 : i32
    %10 = tpu.iota {dimensions = array<i32: 0>} : vector<16x128xi32>
    %11 = vector.broadcast %9 : i32 to vector<16x128xi32>
    %12 = arith.addi %11, %10 : vector<16x128xi32>
    %c12_i32 = arith.constant 12 : i32
    %13 = vector.broadcast %c12_i32 : i32 to vector<16x128xi32>
    %14 = arith.cmpi slt, %12, %13 : vector<16x128xi32>
    %cst = arith.constant 0.000000e+00 : f32
    %15 = vector.broadcast %cst : f32 to vector<16x128xf32>
    %16 = arith.select %14, %6, %15 : vector<16x128xi1>, vector<16x128xf32>
    %c0_4 = arith.constant 0 : index
    %c0_5 = arith.constant 0 : index
    %17 = vector.load %arg5[%c0_4, %c0_5] : memref<8x128xf32, #tpu.memory_space<vmem>>, vector<8x128xf32>
    %18 = vector.shape_cast %16 : vector<16x128xf32> to vector<2x8x128xf32>
    %cst_6 = arith.constant dense<0.000000e+00> : vector<8x128xf32>
    %19 = vector.multi_reduction <add>, %18, %cst_6 [0] : vector<2x8x128xf32> to vector<8x128xf32>
    %20 = arith.addf %17, %19 : vector<8x128xf32>
    %c0_7 = arith.constant 0 : index
    %c0_8 = arith.constant 0 : index
    %21 = vector.load %arg5[%c0_7, %c0_8] : memref<8x128xf32, #tpu.memory_space<vmem>>, vector<8x128xf32>
    tpu.vector_store %arg5[%c0_7, %c0_8], %20 {strides = array<i32>} : memref<8x128xf32, #tpu.memory_space<vmem>>, vector<8x128xf32>,
    %c0_i32_9 = arith.constant 0 : i32
    %22 = arith.cmpi eq, %arg0, %c0_i32_9 : i32
    %c0_i32_10 = arith.constant 0 : i32
    %23 = arith.cmpi eq, %arg1, %c0_i32_10 : i32
    %24 = arith.andi %22, %23 : i1
    %25 = arith.extui %24 : i1 to i32
    %c0_i32_11 = arith.constant 0 : i32
    %26 = arith.cmpi ne, %25, %c0_i32_11 : i32
    scf.if %26 {
      %c0_12 = arith.constant 0 : index
      %c0_13 = arith.constant 0 : index
      %27 = vector.load %arg4[%c0_12, %c0_13] : memref<8x128xf32, #tpu.memory_space<vmem>>, vector<8x128xf32>
      %cst_14 = arith.constant 0.000000e+00 : f32
      %28 = vector.broadcast %cst_14 : f32 to vector<8x128xf32>
      %29 = arith.subf %28, %27 : vector<8x128xf32>
      %cst_15 = arith.constant 0.000000e+00 : f32
      %30 = vector.broadcast %cst_15 : f32 to vector<8x128xf32>
      %31 = arith.maximumf %29, %30 : vector<8x128xf32>
      %32 = math.absf %27 : vector<8x128xf32>
      %cst_16 = arith.constant 0.000000e+00 : f32
      %33 = vector.broadcast %cst_16 : f32 to vector<8x128xf32>
      %34 = arith.subf %33, %32 : vector<8x128xf32>
      %35 = math.exp %34 : vector<8x128xf32>
      %36 = math.log1p %35 : vector<8x128xf32>
      %37 = arith.addf %31, %36 : vector<8x128xf32>
      %38 = tpu.iota {dimensions = array<i32: 0>} : vector<8x128xi32>
      %c0_i32_17 = arith.constant 0 : i32
      %39 = vector.broadcast %c0_i32_17 : i32 to vector<8x128xi32>
      %40 = arith.addi %39, %38 : vector<8x128xi32>
      %c1_i32_18 = arith.constant 1 : i32
      %41 = vector.broadcast %c1_i32_18 : i32 to vector<8x128xi32>
      %42 = arith.cmpi slt, %40, %41 : vector<8x128xi32>
      %cst_19 = arith.constant 0.000000e+00 : f32
      %43 = vector.broadcast %cst_19 : f32 to vector<8x128xf32>
      %44 = arith.select %42, %37, %43 : vector<8x128xi1>, vector<8x128xf32>
      %45 = vector.shape_cast %44 : vector<8x128xf32> to vector<1x8x128xf32>
      %cst_20 = arith.constant dense<0.000000e+00> : vector<8x128xf32>
      %46 = vector.multi_reduction <add>, %45, %cst_20 [0] : vector<1x8x128xf32> to vector<8x128xf32>
      %c0_21 = arith.constant 0 : index
      %c0_22 = arith.constant 0 : index
      %47 = vector.load %arg6[%c0_21, %c0_22] : memref<8x128xf32, #tpu.memory_space<vmem>>, vector<8x128xf32>
      tpu.vector_store %arg6[%c0_21, %c0_22], %46 {strides = array<i32>} : memref<8x128xf32, #tpu.memory_space<vmem>>, vector<8x128xf32>,
    } else {
    }
    return
  }
  func.func @transform_0(%arg0: i32, %arg1: i32) -> (i32, i32) {
    %c1_i32 = arith.constant 1 : i32
    %0 = arith.muli %arg0, %c1_i32 : i32
    %1 = arith.addi %0, %arg1 : i32
    %c0_i32 = arith.constant 0 : i32
    %2 = arith.minsi %1, %c0_i32 : i32
    %c0_i32_0 = arith.constant 0 : i32
    %c0_i32_1 = arith.constant 0 : i32
    return %2, %c0_i32_0 : i32, i32
  }
  func.func @transform_1(%arg0: i32, %arg1: i32) -> (i32, i32) {
    %c1_i32 = arith.constant 1 : i32
    %0 = arith.muli %arg0, %c1_i32 : i32
    %1 = arith.addi %0, %arg1 : i32
    %c0_i32 = arith.constant 0 : i32
    %2 = arith.minsi %1, %c0_i32 : i32
    %c0_i32_0 = arith.constant 0 : i32
    %c0_i32_1 = arith.constant 0 : i32
    return %2, %c0_i32_0 : i32, i32
  }
  func.func @transform_2(%arg0: i32, %arg1: i32) -> (i32, i32) {
    %c0_i32 = arith.constant 0 : i32
    %c0_i32_0 = arith.constant 0 : i32
    %c0_i32_1 = arith.constant 0 : i32
    return %c0_i32, %c0_i32_0 : i32, i32
  }
  func.func @transform_3(%arg0: i32, %arg1: i32) -> (i32, i32) {
    %c0_i32 = arith.constant 0 : i32
    %c0_i32_0 = arith.constant 0 : i32
    return %arg0, %c0_i32 : i32, i32
  }
  func.func @transform_4(%arg0: i32, %arg1: i32) -> (i32, i32) {
    %c0_i32 = arith.constant 0 : i32
    %c0_i32_0 = arith.constant 0 : i32
    return %arg0, %c0_i32 : i32, i32
  }
}

</mosaic_0001>

<llo_original>
// kernel: generator_loss.1
$region0: #{generator_loss.1}
  #allocation0 [shape = 'u32[]', space=smem, size = 0x4, offset = 0x4, fixed_abs, tag = 'smem constant byte address 0x4 - core index']
  #allocation1 [shape = 'u32[144,128]{1,0:T(1,128)}', space=vmem, size = 0x12000, scoped, tag = 'internal scratch']
  %s0 = inlined_call_operand.vmem [shape: f32[16,128], index: 0, kind: input, shape index: {}]
  %s1 = inlined_call_operand.vmem [shape: f32[16,128], index: 1, kind: input, shape index: {}]
  %s2 = inlined_call_operand.vmem [shape: f32[8,128], index: 2, kind: input, shape index: {}]
  %s3 = inlined_call_operand.vmem [shape: f32[8,128], index: 3, kind: output, shape index: {0}]
  %s4 = inlined_call_operand.vmem [shape: f32[8,128], index: 4, kind: output, shape index: {1}]
  %5 = xla_tuple %s3, %s4
  %s6 = sld [smem:[#allocation0]]
  $region38: #{generator_loss.1} parent=0
    _
  %s8 = ssub.s32 1, %s6
  %s9 = scalar_select 0, %s8, %s6
  // Predicated region
  $region2: #{generator_loss.1} parent=0 // pred_check
    _
  $region3: #{generator_loss.1} parent=0 // pred_check_branch
    %11 = sbr.rel (0) target = $region5
  $region4: #{generator_loss.1} parent=0 // pred_region
    %s12 = sadd.s32 0, 0
    %p13 = scmp.lt.s32.totalorder %s12, 0
    %s14 = scalar_select %p13, %s12, 0
    %s15 = smul.u32 2, %s14
    %p16 = scmp.lt.s32.totalorder %s15, 1
    %s17 = scalar_select %p16, %s15, 1
    %s18 = smul.addr %s17, 8
    %s19 = scalar_lea.vmem %s0, %s18
    %s20 = sadd.s32 0, 0
    %p21 = scmp.lt.s32.totalorder %s20, 0
    %s22 = scalar_select %p21, %s20, 0
    %s23 = smul.u32 2, %s22
  $region5: #{generator_loss.1} parent=0 // pred_fallthru
    _
  // Predicated region
  $region6: #{generator_loss.1} parent=0 // pred_check
    _
  $region7: #{generator_loss.1} parent=0 // pred_check_branch
    %25 = sbr.rel (0) target = $region9
  $region8: #{generator_loss.1} parent=0 // pred_region
    %s26 = sadd.s32 0, 0
    %p27 = scmp.lt.s32.totalorder %s26, 0
    %s28 = scalar_select %p27, %s26, 0
    %s29 = smul.u32 2, %s28
    %p30 = scmp.lt.s32.totalorder %s29, 1
    %s31 = scalar_select %p30, %s29, 1
    %s32 = smul.addr %s31, 8
    %s33 = scalar_lea.vmem %s1, %s32
    %s34 = sadd.s32 0, 0
    %p35 = scmp.lt.s32.totalorder %s34, 0
    %s36 = scalar_select %p35, %s34, 0
    %s37 = smul.u32 2, %s36
  $region9: #{generator_loss.1} parent=0 // pred_fallthru
    _
  // Predicated region
  $region10: #{generator_loss.1} parent=0 // pred_check
    _
  $region11: #{generator_loss.1} parent=0 // pred_check_branch
    %39 = sbr.rel (0) target = $region13
  $region12: #{generator_loss.1} parent=0 // pred_region
    _
  $region13: #{generator_loss.1} parent=0 // pred_fallthru
    _
  %s40 = sadd.s32 0, 0
  %p41 = scmp.lt.s32.totalorder %s40, 0
  %s42 = scalar_select %p41, %s40, 0
  %s43 = smul.u32 2, %s42
  %p44 = scmp.lt.s32.totalorder %s43, 1
  %s45 = scalar_select %p44, %s43, 1
  %s46 = smul.addr %s45, 8
  %s47 = scalar_lea.vmem %s0, %s46
  %s48 = sadd.s32 0, 0
  %p49 = scmp.lt.s32.totalorder %s48, 0
  %s50 = scalar_select %p49, %s48, 0
  %s51 = smul.u32 2, %s50
  %p52 = scmp.lt.s32.totalorder %s51, 1
  %s53 = scalar_select %p52, %s51, 1
  %s54 = smul.addr %s53, 8
  %s55 = scalar_lea.vmem %s1, %s54
  %s56 = sadd.s32 0, 0
  %p57 = scmp.lt.s32.totalorder %s56, 0
  %s58 = scalar_select %p57, %s56, 0
  %s59 = smul.u32 2, %s58
  %p60 = scmp.lt.s32.totalorder %s59, 1
  %s61 = scalar_select %p60, %s59, 1
  %s62 = smul.addr %s61, 8
  %s63 = scalar_lea.vmem %s0, %s62
  %s64 = sadd.s32 0, 0
  %p65 = scmp.lt.s32.totalorder %s64, 0
  %s66 = scalar_select %p65, %s64, 0
  %s67 = smul.u32 2, %s66
  %s68 = sadd.s32 0, 0
  %p69 = scmp.lt.s32.totalorder %s68, 0
  %s70 = scalar_select %p69, %s68, 0
  %s71 = smul.u32 2, %s70
  %p72 = scmp.lt.s32.totalorder %s71, 1
  %s73 = scalar_select %p72, %s71, 1
  %s74 = smul.addr %s73, 8
  %s75 = scalar_lea.vmem %s1, %s74
  %s76 = sadd.s32 0, 0
  %p77 = scmp.lt.s32.totalorder %s76, 0
  %s78 = scalar_select %p77, %s76, 0
  %s79 = smul.u32 2, %s78
  %p80 = scmp.eq.s32.totalorder 0, 0
  // Predicated region
  $region14: #{generator_loss.1} parent=0 // pred_check
    %p81 = pneg %p80
  $region15: #{generator_loss.1} parent=0 // pred_check_branch
    %83 = sbr.rel (%p81) target = $region17
  $region16: #{generator_loss.1} parent=0 // pred_region
    %84 = vst [vmem:[%s3] sm:$0xff] 0.0
    %85 = vst [vmem:[%s4] sm:$0xff] 0.0
  $region17: #{generator_loss.1} parent=0 // pred_fallthru
    _
  %v86 = vld [vmem:[%s63] sm:$0xff]
  %v87 = vld [vmem:[%s63 + $0x8] sm:$0xff]
  %v88 = vld [vmem:[%s75] sm:$0xff]
  %v89 = vld [vmem:[%s75 + $0x8] sm:$0xff]
  %v90 = vsub.f32 %v86, %v88
  %v91 = vsub.f32 %v87, %v89
  %v92 = vand.u32 2147483647, %v90
  %v93 = vand.u32 2147483647, %v91
  %s94 = sadd.s32 0, 0
  %s95 = smul.u32 %s94, 16
  %v96 = vlaneseq
  %v97 = vshrl.u32 %v96, 7
  %v98 = vadd.s32 %v97, 8
  %v99 = vstv %s95
  %v100 = vadd.s32 %v99, %v97
  %v101 = vadd.s32 %v99, %v98
  %vm102 = vcmp.lt.s32.totalorder %v100, 12
  %vm103 = vcmp.lt.s32.totalorder %v101, 12
  %v104 = vsel %vm102, %v92, 0.0
  %v105 = vsel %vm103, %v93, 0.0
  %v106 = vld [vmem:[%s3] sm:$0xff]
  %v107 = vadd.f32 %v104, %v105
  %v108 = vadd.f32 %v106, %v107
  %109 = vst [vmem:[%s3] sm:$0xff] %v108
  %p110 = scmp.eq.s32.totalorder 0, 0
  %p111 = pnand %p110, %p80
  %p112 = pneg %p111
  // Predicated region
  $region18: #{generator_loss.1} parent=0 // pred_check
    _
  $region19: #{generator_loss.1} parent=0 // pred_check_branch
    %114 = sbr.rel (%p111) target = $region21
  $region20: #{generator_loss.1} parent=0 // pred_region
    %v115 = vld [vmem:[%s2] sm:$0xff]
    %v116 = vsub.f32 0.0, %v115
    %v117 = vmax.f32 %v116, 0.0
    %v118 = vand.u32 2147483647, %v115
    %v119 = vsub.f32 0.0, %v118
    %v120 = vmul.f32 %v119, 1.442695
    %v121 = vpow.pop %v120
    %v122 = vadd.f32 %v121, 1.0
    %v123 = vlog2.pop %v122
    %v124 = vmul.f32 %v123, 0.6931472
    %v125 = vmul.f32 -0.5, %v121
    %v126 = vadd.f32 %v125, 1.0
    %v127 = vmul.f32 %v126, %v121
    %v128 = vand.u32 2147483647, %v121
    %vm129 = vcmp.lt.f32.partialorder %v128, 0.0004427343
    %v130 = vsel %vm129, %v127, %v124
    %v131 = vadd.f32 %v117, %v130
    %vm132 = vcmp.lt.s32.totalorder %v97, 1
    %v133 = vsel %vm132, %v131, 0.0
    %v134 = vadd.f32 %v133, 0.0
    %135 = vst [vmem:[%s4] sm:$0xff] %v134
  $region21: #{generator_loss.1} parent=0 // pred_fallthru
    _
  // Predicated region
  $region22: #{generator_loss.1} parent=0 // pred_check
    _
  $region23: #{generator_loss.1} parent=0 // pred_check_branch
    %137 = sbr.rel (0) target = $region25
  $region24: #{generator_loss.1} parent=0 // pred_region
    _
  $region25: #{generator_loss.1} parent=0 // pred_fallthru
    _
  // Predicated region
  $region26: #{generator_loss.1} parent=0 // pred_check
    _
  $region27: #{generator_loss.1} parent=0 // pred_check_branch
    %139 = sbr.rel (0) target = $region29
  $region28: #{generator_loss.1} parent=0 // pred_region
    _
  $region29: #{generator_loss.1} parent=0 // pred_fallthru
    _
  // Predicated region
  $region30: #{generator_loss.1} parent=0 // pred_check
    _
  $region31: #{generator_loss.1} parent=0 // pred_check_branch
    %141 = sbr.rel (0) target = $region33
  $region32: #{generator_loss.1} parent=0 // pred_region
    _
  $region33: #{generator_loss.1} parent=0 // pred_fallthru
    _
  // Predicated region
  $region34: #{generator_loss.1} parent=0 // pred_check
    _
  $region35: #{generator_loss.1} parent=0 // pred_check_branch
    %143 = sbr.rel (0) target = $region37
  $region36: #{generator_loss.1} parent=0 // pred_region
    _
  $region37: #{generator_loss.1} parent=0 // pred_fallthru
    _

</llo_original>
